<compile_context>
chip_gen: v6e
topology: v6e:2x2x1
jax: 0.10.0
libtpu: 0.0.40
codegen_flags: <defaults>
</compile_context>

<pallas_src>
import jax
import jax.numpy as jnp
from jax.experimental import pallas as pl
from jax.experimental.pallas import tpu as pltpu

R = 5          # num_relations
RP1 = R + 1    # relations + identity pseudo-relation (carries the root/self term)
NB = 4         # num_bases
LAYERS = 4     # number of stacked RGCN layers
C = 32         # padded input-channel width (layer 0's Cin=4 is zero-padded to 32)
COUT = 32      # out_channels of every RGCN layer


# ---------------------------------------------------------------------------
# Pallas kernel: fused 4-layer RGCN + tanh
# ---------------------------------------------------------------------------
def _igmc_rgcn_stack_kernel(a_ref, x0_ref, w_ref, b_ref, o_ref):
    """Fused 4-layer RGCN + tanh.

    a_ref:  [N, (R+1)*N]        bf16  A_ext[i, r*N + j] = A_norm[r, i, j] for r<R,
                                      A_ext[i, R*N + j] = I[i, j] (root pseudo-relation)
    x0_ref: [N, C]              bf16  layer-0 features (zero padded 4 -> 32)
    w_ref:  [L, C, (R+1)*COUT]  bf16  per-layer weights, hstacked over relation
                                      (block r = W[r] for r<R, block R = Wroot)
    b_ref:  [L, 1, COUT]        f32   per-layer bias
    o_ref:  [N, L*COUT]         f32   concatenated tanh outputs of the 4 layers
    """
    a = a_ref[...]                      # adjacency resident in VMEM for all 4 layers
    x = x0_ref[...]                     # bf16 [N, C]
    hs = []

    for l in range(LAYERS):             # static layer loop (fused)
        # One wide projection matmul per layer: [N, C] @ [C, (R+1)*COUT]
        # (root projection absorbed as the last COUT-wide block).
        xw_wide = jnp.dot(x, w_ref[l], preferred_element_type=jnp.float32)
        xw_wide = xw_wide.astype(jnp.bfloat16)            # [N, (R+1)*COUT]

        # Register-level reorder (XLU: lane slices + sublane concat) to the
        # stacked layout [(R+1)*N, COUT] matching a's contraction axis.
        xw_stack = jnp.concatenate(
            [xw_wide[:, r * COUT:(r + 1) * COUT] for r in range(RP1)], axis=0)

        # One deep-K MXU matmul == sum_r A[r] @ X @ W[r]  +  X @ Wroot
        acc = jnp.dot(a, xw_stack, preferred_element_type=jnp.float32)  # [N, COUT] f32
        h = jnp.tanh(acc + b_ref[l])                      # f32 bias + tanh
        hs.append(h)
        x = h.astype(jnp.bfloat16)                        # feed next layer in bf16

    # Single unmasked lane-dense store of the concatenated [N, 128] block.
    o_ref[...] = jnp.concatenate(hs, axis=-1)


def igmc_rgcn_stack(a_ext, x0, w, bias):
    n = x0.shape[0]
    out_dim = LAYERS * COUT

    def _nbytes(arr):
        return int(arr.size) * arr.dtype.itemsize

    out_bytes = n * out_dim * 4
    io_bytes = _nbytes(a_ext) + _nbytes(x0) + _nbytes(w) + _nbytes(bias) + out_bytes
    # vmem limit derived from actual (double-buffered) tile sizes + headroom,
    # capped well under v7x's 64 MiB physical VMEM per TensorCore.
    vmem_limit = int(min(40 * 1024 * 1024, 2 * io_bytes + 4 * 1024 * 1024))

    flops = LAYERS * (2 * n * C * RP1 * COUT          # wide projection matmul
                      + 2 * n * (RP1 * n) * COUT)     # deep-K adjacency matmul
    cost = pl.CostEstimate(
        flops=flops,
        transcendentals=LAYERS * n * COUT,            # tanh
        bytes_accessed=io_bytes,
    )

    return pl.pallas_call(
        _igmc_rgcn_stack_kernel,
        out_shape=jax.ShapeDtypeStruct((n, out_dim), jnp.float32),
        grid=(1,),
        in_specs=[
            pl.BlockSpec((n, RP1 * n), lambda i: (0, 0)),
            pl.BlockSpec((n, C), lambda i: (0, 0)),
            pl.BlockSpec((LAYERS, C, RP1 * COUT), lambda i: (0, 0, 0)),
            pl.BlockSpec((LAYERS, 1, COUT), lambda i: (0, 0, 0)),
        ],
        out_specs=pl.BlockSpec((n, out_dim), lambda i: (0, 0)),
        compiler_params=pltpu.CompilerParams(
            dimension_semantics=("arbitrary",),
            vmem_limit_bytes=vmem_limit,
        ),
        cost_estimate=cost,
    )(a_ext, x0, w, bias)


# ---------------------------------------------------------------------------
# JAX glue (graph preprocessing, parameter setup, head)
# ---------------------------------------------------------------------------
def build_adj_ext(edge_index, edge_type, num_nodes):
    """Dense per-relation adjacency (mean-normalized over incoming edges),
    relation-folded into the contraction axis, with an identity block appended
    for the root/self term:  A_ext = [A_flat | I_N],  shape [N, (R+1)*N]."""
    src, dst = edge_index[0], edge_index[1]
    A = jnp.zeros((R, num_nodes, num_nodes), jnp.float32)
    A = A.at[edge_type, dst, src].add(1.0)
    deg = jnp.sum(A, axis=-1, keepdims=True)             # incoming count per relation
    A = jnp.where(deg > 0, A / jnp.where(deg > 0, deg, 1.0), 0.0)
    a_flat = jnp.transpose(A, (1, 0, 2)).reshape(num_nodes, R * num_nodes)
    eye = jnp.eye(num_nodes, dtype=jnp.float32)
    return jnp.concatenate([a_flat, eye], axis=1).astype(jnp.bfloat16)


def pack_rgcn_params(rgcn_params):
    """Pad layer-0 Cin 4->32, hstack per-relation weights + root over the output
    axis (root = last block, matching the identity pseudo-relation), pre-cast
    to bf16, stack over layers.  Bias stays f32."""
    w_list, bias_list = [], []
    for (W, root, bias) in rgcn_params:                   # W: [R, cin, 32]
        cin = W.shape[1]
        Wp = jnp.zeros((R, C, COUT), jnp.float32).at[:, :cin, :].set(W)
        rootp = jnp.zeros((C, COUT), jnp.float32).at[:cin, :].set(root)
        blocks = [Wp[r] for r in range(R)] + [rootp]      # block r = W[r], block R = root
        w_list.append(jnp.concatenate(blocks, axis=1))    # [C, (R+1)*COUT]
        bias_list.append(bias)
    w = jnp.stack(w_list).astype(jnp.bfloat16)            # [L, C, (R+1)*COUT] bf16
    bias = jnp.stack(bias_list).astype(jnp.float32)       # [L, 1, COUT] f32
    return w, bias


def init_params(key):
    """Deterministic synthetic parameters (shapes match the PyTorch module)."""
    rgcn_params = []
    for (cin, cout) in [(4, 32), (32, 32), (32, 32), (32, 32)]:
        key, k1, k2, k3, k4 = jax.random.split(key, 5)
        basis = jax.random.normal(k1, (NB, cin, cout), jnp.float32) * 0.1
        comp = jax.random.normal(k2, (R, NB), jnp.float32) * 0.1
        root = jax.random.normal(k3, (cin, cout), jnp.float32) * 0.1
        bias = jax.random.normal(k4, (1, cout), jnp.float32) * 0.1
        W = jnp.einsum('rb,bio->rio', comp, basis)        # num_bases -> per-relation weight
        rgcn_params.append((W, root, bias))
    key, k1, k2, k3, k4 = jax.random.split(key, 5)
    W1 = jax.random.normal(k1, (256, 128), jnp.float32) * 0.05
    b1 = jax.random.normal(k2, (1, 128), jnp.float32) * 0.05
    W2 = jax.random.normal(k3, (128, 1), jnp.float32) * 0.05
    b2 = jax.random.normal(k4, (1, 1), jnp.float32) * 0.05
    return rgcn_params, (W1, b1, W2, b2)


def igmc_forward(x, edge_index, edge_type, rgcn_params, mlp_params, num_subgraphs):
    n0 = x.shape[0]
    n = ((n0 + 15) // 16) * 16                            # pad for bf16 sublane tiling
    a_ext = build_adj_ext(edge_index, edge_type, n)       # [n, (R+1)*n] bf16
    x0 = jnp.zeros((n, C), jnp.float32).at[:n0, :x.shape[1]].set(x)
    x0 = x0.astype(jnp.bfloat16)

    w, bias = pack_rgcn_params(rgcn_params)
    # Fused 4-layer RGCN stack (all subgraphs batched block-diagonally), [n0, 128]
    h = igmc_rgcn_stack(a_ext, x0, w, bias)[:n0]

    # h[x[:,0]==True], h[x[:,1]==True] (one target user + one target item per subgraph)
    user_idx = jnp.nonzero(x[:, 0] == 1.0, size=num_subgraphs)[0]
    item_idx = jnp.nonzero(x[:, 1] == 1.0, size=num_subgraphs)[0]
    g = jnp.concatenate([h[user_idx], h[item_idx]], axis=1)   # [B, 256]

    # Tiny gather + MLP head: left to XLA (dispatch + HBM round trip of g
    # dominates the compute at this size).
    W1, b1, W2, b2 = mlp_params
    out = jnp.maximum(g @ W1 + b1, 0.0) @ W2 + b2             # [B, 1]
    return out[:, 0]                                          # [B]


# ---------------------------------------------------------------------------
# Demo
# ---------------------------------------------------------------------------
if __name__ == "__main__":
    key = jax.random.PRNGKey(0)

    B = 2                 # number of enclosing subgraphs (one user + one item node each)
    nodes_per_graph = 8
    N = B * nodes_per_graph

    # node features: one-hot labels in {0,1,2,3}; label 0 = target user, 1 = target item
    labels = jnp.array([0, 1, 2, 3, 2, 3, 2, 3,
                        0, 1, 2, 3, 2, 3, 2, 3], dtype=jnp.int32)
    x = jax.nn.one_hot(labels, 4, dtype=jnp.float32)      # [16, 4]

    # random intra-subgraph edges with relation types in [0, 5)
    E_per = 20
    key, ks, kd, kt = jax.random.split(key, 4)
    src0 = jax.random.randint(ks, (E_per,), 0, nodes_per_graph)
    dst0 = jax.random.randint(kd, (E_per,), 0, nodes_per_graph)
    src = jnp.concatenate([src0, src0 + nodes_per_graph])
    dst = jnp.concatenate([dst0, dst0 + nodes_per_graph])
    edge_index = jnp.stack([src, dst]).astype(jnp.int32)   # [2, 40]
    edge_type = jax.random.randint(kt, (2 * E_per,), 0, R).astype(jnp.int32)  # [40]

    key, kp = jax.random.split(key)
    rgcn_params, mlp_params = init_params(kp)

    out = igmc_forward(x, edge_index, edge_type, rgcn_params, mlp_params, B)
    out = jax.block_until_ready(out)
    assert out.shape == (B,) and out.dtype == jnp.float32
    print("KERNEL_OK")
</pallas_src>

<mosaic_0001>
module attributes {stable_mosaic.version = 11 : i64} {
  func.func @_igmc_rgcn_stack_kernel(%arg0: i32, %arg1: memref<16x96xbf16, #tpu.memory_space<vmem>>, %arg2: memref<16x32xbf16, #tpu.memory_space<vmem>>, %arg3: memref<4x32x192xbf16, #tpu.memory_space<vmem>>, %arg4: memref<4x1x32xf32, #tpu.memory_space<vmem>>, %arg5: memref<16x128xf32, #tpu.memory_space<vmem>>) attributes {dimension_semantics = [#tpu.dimension_semantics<arbitrary>], iteration_bounds = array<i64: 1>, scalar_prefetch = 0 : i64, scratch_operands = 0 : i64, tpu.core_type = #tpu.core_type<tc>, window_params = [{pipeline_mode = #tpu.pipeline_mode<synchronous>, transform_indices = @transform_0, window_bounds = array<i64: 16, 96>}, {pipeline_mode = #tpu.pipeline_mode<synchronous>, transform_indices = @transform_1, window_bounds = array<i64: 16, 32>}, {pipeline_mode = #tpu.pipeline_mode<synchronous>, transform_indices = @transform_2, window_bounds = array<i64: 4, 32, 192>}, {pipeline_mode = #tpu.pipeline_mode<synchronous>, transform_indices = @transform_3, window_bounds = array<i64: 4, 1, 32>}, {pipeline_mode = #tpu.pipeline_mode<synchronous>, transform_indices = @transform_4, window_bounds = array<i64: 16, 128>}]} {
    %c0 = arith.constant 0 : index
    %c0_0 = arith.constant 0 : index
    %0 = vector.load %arg1[%c0, %c0_0] : memref<16x96xbf16, #tpu.memory_space<vmem>>, vector<16x96xbf16>
    %c0_1 = arith.constant 0 : index
    %c0_2 = arith.constant 0 : index
    %1 = vector.load %arg2[%c0_1, %c0_2] : memref<16x32xbf16, #tpu.memory_space<vmem>>, vector<16x32xbf16>
    %c0_3 = arith.constant 0 : index
    %c0_4 = arith.constant 0 : index
    %c0_5 = arith.constant 0 : index
    %2 = vector.load %arg3[%c0_3, %c0_4, %c0_5] : memref<4x32x192xbf16, #tpu.memory_space<vmem>>, vector<1x32x192xbf16>
    %3 = vector.shape_cast %2 : vector<1x32x192xbf16> to vector<32x192xbf16>
    %cst = arith.constant dense<0.000000e+00> : vector<16x192xf32>
    %4 = tpu.matmul %1, %3, %cst {dimension_numbers = #tpu.dot_dimension_numbers<[1], [0], [0], [1], [0, 0, 1, 1], [], []>} : vector<16x32xbf16>, vector<32x192xbf16>, vector<16x192xf32> -> vector<16x192xf32>
    %5 = arith.truncf %4 : vector<16x192xf32> to vector<16x192xbf16>
    %6 = vector.extract_strided_slice %5 {offsets = [0, 0], sizes = [16, 32], strides = [1, 1]} : vector<16x192xbf16> to vector<16x32xbf16>
    %7 = vector.extract_strided_slice %5 {offsets = [0, 32], sizes = [16, 32], strides = [1, 1]} : vector<16x192xbf16> to vector<16x32xbf16>
    %8 = vector.extract_strided_slice %5 {offsets = [0, 64], sizes = [16, 32], strides = [1, 1]} : vector<16x192xbf16> to vector<16x32xbf16>
    %9 = vector.extract_strided_slice %5 {offsets = [0, 96], sizes = [16, 32], strides = [1, 1]} : vector<16x192xbf16> to vector<16x32xbf16>
    %10 = vector.extract_strided_slice %5 {offsets = [0, 128], sizes = [16, 32], strides = [1, 1]} : vector<16x192xbf16> to vector<16x32xbf16>
    %11 = vector.extract_strided_slice %5 {offsets = [0, 160], sizes = [16, 32], strides = [1, 1]} : vector<16x192xbf16> to vector<16x32xbf16>
    %12 = tpu.concatenate %6, %7, %8, %9, %10, %11 in 0 : vector<16x32xbf16>, vector<16x32xbf16>, vector<16x32xbf16>, vector<16x32xbf16>, vector<16x32xbf16>, vector<16x32xbf16> -> vector<96x32xbf16>
    %cst_6 = arith.constant dense<0.000000e+00> : vector<16x32xf32>
    %13 = tpu.matmul %0, %12, %cst_6 {dimension_numbers = #tpu.dot_dimension_numbers<[1], [0], [0], [1], [0, 0, 1, 1], [], []>} : vector<16x96xbf16>, vector<96x32xbf16>, vector<16x32xf32> -> vector<16x32xf32>
    %c0_7 = arith.constant 0 : index
    %c0_8 = arith.constant 0 : index
    %c0_9 = arith.constant 0 : index
    %14 = vector.load %arg4[%c0_7, %c0_8, %c0_9] : memref<4x1x32xf32, #tpu.memory_space<vmem>>, vector<1x1x32xf32>
    %15 = vector.shape_cast %14 : vector<1x1x32xf32> to vector<1x32xf32>
    %16 = vector.broadcast %15 : vector<1x32xf32> to vector<16x32xf32>
    %17 = arith.addf %13, %16 : vector<16x32xf32>
    %18 = math.tanh %17 : vector<16x32xf32>
    %19 = arith.truncf %18 : vector<16x32xf32> to vector<16x32xbf16>
    %c1 = arith.constant 1 : index
    %c0_10 = arith.constant 0 : index
    %c0_11 = arith.constant 0 : index
    %20 = vector.load %arg3[%c1, %c0_10, %c0_11] : memref<4x32x192xbf16, #tpu.memory_space<vmem>>, vector<1x32x192xbf16>
    %21 = vector.shape_cast %20 : vector<1x32x192xbf16> to vector<32x192xbf16>
    %cst_12 = arith.constant dense<0.000000e+00> : vector<16x192xf32>
    %22 = tpu.matmul %19, %21, %cst_12 {dimension_numbers = #tpu.dot_dimension_numbers<[1], [0], [0], [1], [0, 0, 1, 1], [], []>} : vector<16x32xbf16>, vector<32x192xbf16>, vector<16x192xf32> -> vector<16x192xf32>
    %23 = arith.truncf %22 : vector<16x192xf32> to vector<16x192xbf16>
    %24 = vector.extract_strided_slice %23 {offsets = [0, 0], sizes = [16, 32], strides = [1, 1]} : vector<16x192xbf16> to vector<16x32xbf16>
    %25 = vector.extract_strided_slice %23 {offsets = [0, 32], sizes = [16, 32], strides = [1, 1]} : vector<16x192xbf16> to vector<16x32xbf16>
    %26 = vector.extract_strided_slice %23 {offsets = [0, 64], sizes = [16, 32], strides = [1, 1]} : vector<16x192xbf16> to vector<16x32xbf16>
    %27 = vector.extract_strided_slice %23 {offsets = [0, 96], sizes = [16, 32], strides = [1, 1]} : vector<16x192xbf16> to vector<16x32xbf16>
    %28 = vector.extract_strided_slice %23 {offsets = [0, 128], sizes = [16, 32], strides = [1, 1]} : vector<16x192xbf16> to vector<16x32xbf16>
    %29 = vector.extract_strided_slice %23 {offsets = [0, 160], sizes = [16, 32], strides = [1, 1]} : vector<16x192xbf16> to vector<16x32xbf16>
    %30 = tpu.concatenate %24, %25, %26, %27, %28, %29 in 0 : vector<16x32xbf16>, vector<16x32xbf16>, vector<16x32xbf16>, vector<16x32xbf16>, vector<16x32xbf16>, vector<16x32xbf16> -> vector<96x32xbf16>
    %cst_13 = arith.constant dense<0.000000e+00> : vector<16x32xf32>
    %31 = tpu.matmul %0, %30, %cst_13 {dimension_numbers = #tpu.dot_dimension_numbers<[1], [0], [0], [1], [0, 0, 1, 1], [], []>} : vector<16x96xbf16>, vector<96x32xbf16>, vector<16x32xf32> -> vector<16x32xf32>
    %c1_14 = arith.constant 1 : index
    %c0_15 = arith.constant 0 : index
    %c0_16 = arith.constant 0 : index
    %32 = vector.load %arg4[%c1_14, %c0_15, %c0_16] : memref<4x1x32xf32, #tpu.memory_space<vmem>>, vector<1x1x32xf32>
    %33 = vector.shape_cast %32 : vector<1x1x32xf32> to vector<1x32xf32>
    %34 = vector.broadcast %33 : vector<1x32xf32> to vector<16x32xf32>
    %35 = arith.addf %31, %34 : vector<16x32xf32>
    %36 = math.tanh %35 : vector<16x32xf32>
    %37 = arith.truncf %36 : vector<16x32xf32> to vector<16x32xbf16>
    %c2 = arith.constant 2 : index
    %c0_17 = arith.constant 0 : index
    %c0_18 = arith.constant 0 : index
    %38 = vector.load %arg3[%c2, %c0_17, %c0_18] : memref<4x32x192xbf16, #tpu.memory_space<vmem>>, vector<1x32x192xbf16>
    %39 = vector.shape_cast %38 : vector<1x32x192xbf16> to vector<32x192xbf16>
    %cst_19 = arith.constant dense<0.000000e+00> : vector<16x192xf32>
    %40 = tpu.matmul %37, %39, %cst_19 {dimension_numbers = #tpu.dot_dimension_numbers<[1], [0], [0], [1], [0, 0, 1, 1], [], []>} : vector<16x32xbf16>, vector<32x192xbf16>, vector<16x192xf32> -> vector<16x192xf32>
    %41 = arith.truncf %40 : vector<16x192xf32> to vector<16x192xbf16>
    %42 = vector.extract_strided_slice %41 {offsets = [0, 0], sizes = [16, 32], strides = [1, 1]} : vector<16x192xbf16> to vector<16x32xbf16>
    %43 = vector.extract_strided_slice %41 {offsets = [0, 32], sizes = [16, 32], strides = [1, 1]} : vector<16x192xbf16> to vector<16x32xbf16>
    %44 = vector.extract_strided_slice %41 {offsets = [0, 64], sizes = [16, 32], strides = [1, 1]} : vector<16x192xbf16> to vector<16x32xbf16>
    %45 = vector.extract_strided_slice %41 {offsets = [0, 96], sizes = [16, 32], strides = [1, 1]} : vector<16x192xbf16> to vector<16x32xbf16>
    %46 = vector.extract_strided_slice %41 {offsets = [0, 128], sizes = [16, 32], strides = [1, 1]} : vector<16x192xbf16> to vector<16x32xbf16>
    %47 = vector.extract_strided_slice %41 {offsets = [0, 160], sizes = [16, 32], strides = [1, 1]} : vector<16x192xbf16> to vector<16x32xbf16>
    %48 = tpu.concatenate %42, %43, %44, %45, %46, %47 in 0 : vector<16x32xbf16>, vector<16x32xbf16>, vector<16x32xbf16>, vector<16x32xbf16>, vector<16x32xbf16>, vector<16x32xbf16> -> vector<96x32xbf16>
    %cst_20 = arith.constant dense<0.000000e+00> : vector<16x32xf32>
    %49 = tpu.matmul %0, %48, %cst_20 {dimension_numbers = #tpu.dot_dimension_numbers<[1], [0], [0], [1], [0, 0, 1, 1], [], []>} : vector<16x96xbf16>, vector<96x32xbf16>, vector<16x32xf32> -> vector<16x32xf32>
    %c2_21 = arith.constant 2 : index
    %c0_22 = arith.constant 0 : index
    %c0_23 = arith.constant 0 : index
    %50 = vector.load %arg4[%c2_21, %c0_22, %c0_23] : memref<4x1x32xf32, #tpu.memory_space<vmem>>, vector<1x1x32xf32>
    %51 = vector.shape_cast %50 : vector<1x1x32xf32> to vector<1x32xf32>
    %52 = vector.broadcast %51 : vector<1x32xf32> to vector<16x32xf32>
    %53 = arith.addf %49, %52 : vector<16x32xf32>
    %54 = math.tanh %53 : vector<16x32xf32>
    %55 = arith.truncf %54 : vector<16x32xf32> to vector<16x32xbf16>
    %c3 = arith.constant 3 : index
    %c0_24 = arith.constant 0 : index
    %c0_25 = arith.constant 0 : index
    %56 = vector.load %arg3[%c3, %c0_24, %c0_25] : memref<4x32x192xbf16, #tpu.memory_space<vmem>>, vector<1x32x192xbf16>
    %57 = vector.shape_cast %56 : vector<1x32x192xbf16> to vector<32x192xbf16>
    %cst_26 = arith.constant dense<0.000000e+00> : vector<16x192xf32>
    %58 = tpu.matmul %55, %57, %cst_26 {dimension_numbers = #tpu.dot_dimension_numbers<[1], [0], [0], [1], [0, 0, 1, 1], [], []>} : vector<16x32xbf16>, vector<32x192xbf16>, vector<16x192xf32> -> vector<16x192xf32>
    %59 = arith.truncf %58 : vector<16x192xf32> to vector<16x192xbf16>
    %60 = vector.extract_strided_slice %59 {offsets = [0, 0], sizes = [16, 32], strides = [1, 1]} : vector<16x192xbf16> to vector<16x32xbf16>
    %61 = vector.extract_strided_slice %59 {offsets = [0, 32], sizes = [16, 32], strides = [1, 1]} : vector<16x192xbf16> to vector<16x32xbf16>
    %62 = vector.extract_strided_slice %59 {offsets = [0, 64], sizes = [16, 32], strides = [1, 1]} : vector<16x192xbf16> to vector<16x32xbf16>
    %63 = vector.extract_strided_slice %59 {offsets = [0, 96], sizes = [16, 32], strides = [1, 1]} : vector<16x192xbf16> to vector<16x32xbf16>
    %64 = vector.extract_strided_slice %59 {offsets = [0, 128], sizes = [16, 32], strides = [1, 1]} : vector<16x192xbf16> to vector<16x32xbf16>
    %65 = vector.extract_strided_slice %59 {offsets = [0, 160], sizes = [16, 32], strides = [1, 1]} : vector<16x192xbf16> to vector<16x32xbf16>
    %66 = tpu.concatenate %60, %61, %62, %63, %64, %65 in 0 : vector<16x32xbf16>, vector<16x32xbf16>, vector<16x32xbf16>, vector<16x32xbf16>, vector<16x32xbf16>, vector<16x32xbf16> -> vector<96x32xbf16>
    %cst_27 = arith.constant dense<0.000000e+00> : vector<16x32xf32>
    %67 = tpu.matmul %0, %66, %cst_27 {dimension_numbers = #tpu.dot_dimension_numbers<[1], [0], [0], [1], [0, 0, 1, 1], [], []>} : vector<16x96xbf16>, vector<96x32xbf16>, vector<16x32xf32> -> vector<16x32xf32>
    %c3_28 = arith.constant 3 : index
    %c0_29 = arith.constant 0 : index
    %c0_30 = arith.constant 0 : index
    %68 = vector.load %arg4[%c3_28, %c0_29, %c0_30] : memref<4x1x32xf32, #tpu.memory_space<vmem>>, vector<1x1x32xf32>
    %69 = vector.shape_cast %68 : vector<1x1x32xf32> to vector<1x32xf32>
    %70 = vector.broadcast %69 : vector<1x32xf32> to vector<16x32xf32>
    %71 = arith.addf %67, %70 : vector<16x32xf32>
    %72 = math.tanh %71 : vector<16x32xf32>
    %73 = tpu.concatenate %18, %36, %54, %72 in 1 : vector<16x32xf32>, vector<16x32xf32>, vector<16x32xf32>, vector<16x32xf32> -> vector<16x128xf32>
    %c0_31 = arith.constant 0 : index
    %c0_32 = arith.constant 0 : index
    %74 = vector.load %arg5[%c0_31, %c0_32] : memref<16x128xf32, #tpu.memory_space<vmem>>, vector<16x128xf32>
    tpu.vector_store %arg5[%c0_31, %c0_32], %73 {strides = array<i32>} : memref<16x128xf32, #tpu.memory_space<vmem>>, vector<16x128xf32>,
    return
  }
  func.func @transform_0(%arg0: i32) -> (i32, i32) {
    %c0_i32 = arith.constant 0 : i32
    %c0_i32_0 = arith.constant 0 : i32
    %c0_i32_1 = arith.constant 0 : i32
    return %c0_i32, %c0_i32_0 : i32, i32
  }
  func.func @transform_1(%arg0: i32) -> (i32, i32) {
    %c0_i32 = arith.constant 0 : i32
    %c0_i32_0 = arith.constant 0 : i32
    %c0_i32_1 = arith.constant 0 : i32
    return %c0_i32, %c0_i32_0 : i32, i32
  }
  func.func @transform_2(%arg0: i32) -> (i32, i32, i32) {
    %c0_i32 = arith.constant 0 : i32
    %c0_i32_0 = arith.constant 0 : i32
    %c0_i32_1 = arith.constant 0 : i32
    %c0_i32_2 = arith.constant 0 : i32
    return %c0_i32, %c0_i32_0, %c0_i32_1 : i32, i32, i32
  }
  func.func @transform_3(%arg0: i32) -> (i32, i32, i32) {
    %c0_i32 = arith.constant 0 : i32
    %c0_i32_0 = arith.constant 0 : i32
    %c0_i32_1 = arith.constant 0 : i32
    %c0_i32_2 = arith.constant 0 : i32
    return %c0_i32, %c0_i32_0, %c0_i32_1 : i32, i32, i32
  }
  func.func @transform_4(%arg0: i32) -> (i32, i32) {
    %c0_i32 = arith.constant 0 : i32
    %c0_i32_0 = arith.constant 0 : i32
    %c0_i32_1 = arith.constant 0 : i32
    return %c0_i32, %c0_i32_0 : i32, i32
  }
}

</mosaic_0001>

<llo_original>
// kernel: tpu_custom_call.1
$region0: #{tpu_custom_call.1}
  #allocation0 [shape = 'u32[]', space=smem, size = 0x4, offset = 0x4, fixed_abs, tag = 'smem constant byte address 0x4 - core index']
  #allocation1 [shape = 'u32[144,128]{1,0:T(1,128)}', space=vmem, size = 0x12000, scoped, tag = 'internal scratch']
  %s0 = inlined_call_operand.hbm [shape: bf16[16,96], index: 0, kind: input, shape index: {}]
  %s1 = inlined_call_operand.hbm [shape: bf16[16,32], index: 1, kind: input, shape index: {}]
  %s2 = inlined_call_operand.hbm [shape: bf16[4,32,192], index: 2, kind: input, shape index: {}]
  %s3 = inlined_call_operand.vmem [shape: f32[4,1,32], index: 3, kind: input, shape index: {}]
  %s4 = inlined_call_operand.hbm [shape: f32[16,128], index: 4, kind: output, shape index: {}]
  %s5 = sld [smem:[#allocation0]]
  $region38: #{tpu_custom_call.1} parent=0
    _
  %s7 = ssub.s32 1, %s5
  %s8 = scalar_select 0, %s7, %s5
  $region1: #{tpu_custom_call.1} parent=0
    #allocation2 [shape = 'u8[4096]{0}', space=vmem, size = 0x1000, scoped, tag = 'input window, operand 0, single buffered']
    #allocation3 [shape = 's32[1]{0}', space=sflag, size = 0x4, scoped, tag = 'scoped memory for tpu_custom_call.1']
    #allocation4 [shape = 's32[1]{0}', space=sflag, size = 0x4, scoped, tag = 'scoped memory for tpu_custom_call.1']
    #allocation5 [shape = 'u8[4096]{0}', space=vmem, size = 0x1000, scoped, tag = 'input window, operand 1, single buffered']
    #allocation6 [shape = 's32[1]{0}', space=sflag, size = 0x4, scoped, tag = 'scoped memory for tpu_custom_call.1']
    #allocation7 [shape = 'u8[65536]{0}', space=vmem, size = 0x10000, scoped, tag = 'input window, operand 2, single buffered']
    #allocation8 [shape = 'u8[8192]{0}', space=vmem, size = 0x2000, scoped, tag = 'output window, operand 0, single buffered']
    %9 = vsyncpa [#allocation3], 0
    %10 = vsyncpa [#allocation6], 0
    %11 = vsyncpa [#allocation4], 0
    // Predicated region
    $region2: #{tpu_custom_call.1} parent=1 // pred_check
      _
    $region3: #{tpu_custom_call.1} parent=1 // pred_check_branch
      %13 = sbr.rel (0) target = $region5
    $region4: #{tpu_custom_call.1} parent=1 // pred_region
      %s15 = ssub.s32 128, 128
      %16 = vsyncadd [#allocation3], %s15
      %s17 = sshll.u32 [#allocation2], 4
      %s18 = int_to_ptr.vmem [resolvable:$true] %s17
      %23 = dma.hbm_to_vmem [thread:$0]  %s0, 128, %s18, [#allocation3], 64, 64, 4
    $region5: #{tpu_custom_call.1} parent=1 // pred_fallthru
      _
    // Predicated region
    $region6: #{tpu_custom_call.1} parent=1 // pred_check
      _
    $region7: #{tpu_custom_call.1} parent=1 // pred_check_branch
      %25 = sbr.rel (0) target = $region9
    $region8: #{tpu_custom_call.1} parent=1 // pred_region
      %s27 = ssub.s32 128, 128
      %28 = vsyncadd [#allocation6], %s27
      %s29 = sshll.u32 [#allocation5], 4
      %s30 = int_to_ptr.vmem [resolvable:$true] %s29
      %35 = dma.hbm_to_vmem [thread:$0]  %s1, 128, %s30, [#allocation6], 64, 64, 4
    $region9: #{tpu_custom_call.1} parent=1 // pred_fallthru
      _
    // Predicated region
    $region10: #{tpu_custom_call.1} parent=1 // pred_check
      _
    $region11: #{tpu_custom_call.1} parent=1 // pred_check_branch
      %37 = sbr.rel (0) target = $region13
    $region12: #{tpu_custom_call.1} parent=1 // pred_region
      %s39 = ssub.s32 2048, 2048
      %40 = vsyncadd [#allocation6], %s39
      %s41 = sshll.u32 [#allocation7], 4
      %s42 = int_to_ptr.vmem [resolvable:$true] %s41
      %47 = dma.hbm_to_vmem [thread:$0]  %s2, 2048, %s42, [#allocation6], 128, 128, 8
    $region13: #{tpu_custom_call.1} parent=1 // pred_fallthru
      _
    // Predicated region
    $region14: #{tpu_custom_call.1} parent=1 // pred_check
      _
    $region15: #{tpu_custom_call.1} parent=1 // pred_check_branch
      %49 = sbr.rel (0) target = $region17
    $region16: #{tpu_custom_call.1} parent=1 // pred_region
      _
    $region17: #{tpu_custom_call.1} parent=1 // pred_fallthru
      _
    // Predicated region
    $region18: #{tpu_custom_call.1} parent=1 // pred_check
      _
    $region19: #{tpu_custom_call.1} parent=1 // pred_check_branch
      %51 = sbr.rel (0) target = $region21
    $region20: #{tpu_custom_call.1} parent=1 // pred_region
      %52 = dma.done [#allocation3], 128
    $region21: #{tpu_custom_call.1} parent=1 // pred_fallthru
      _
    // Predicated region
    $region22: #{tpu_custom_call.1} parent=1 // pred_check
      _
    $region23: #{tpu_custom_call.1} parent=1 // pred_check_branch
      %54 = sbr.rel (0) target = $region25
    $region24: #{tpu_custom_call.1} parent=1 // pred_region
      %55 = dma.done [#allocation6], 128
    $region25: #{tpu_custom_call.1} parent=1 // pred_fallthru
      _
    // Predicated region
    $region26: #{tpu_custom_call.1} parent=1 // pred_check
      _
    $region27: #{tpu_custom_call.1} parent=1 // pred_check_branch
      %57 = sbr.rel (0) target = $region29
    $region28: #{tpu_custom_call.1} parent=1 // pred_region
      %58 = dma.done [#allocation6], 2048
    $region29: #{tpu_custom_call.1} parent=1 // pred_fallthru
      _
    %v60 = vld [vmem:[#allocation2] sm:$0xf]
    %v61 = vld [vmem:[#allocation2 + $0x4] sm:$0xf]
    %v62 = vld [vmem:[#allocation5] sm:$0xf]
    %v63 = vld [vmem:[#allocation5 + $0x4] sm:$0xf]
    %v64 = vld [vmem:[#allocation7] sm:$0xff]
    %v65 = vld [vmem:[#allocation7 + $0x8] sm:$0xff]
    %v66 = vld [vmem:[#allocation7 + $0x10] sm:$0xff]
    %v67 = vld [vmem:[#allocation7 + $0x18] sm:$0xff]
    %v70 = vunpack.c.l.b16 %v62
    %v71 = vunpack.c.l.b16 %v63
    %v72 = vpack.c.b16 %v71, %v70
    %v77 = vunpack.c.l.b16 %v64
    %v78 = vunpack.c.h.b16 %v64
    %v79 = vunpack.c.l.b16 %v65
    %v80 = vunpack.c.h.b16 %v65
    %v81 = vunpack.c.l.b16 %v66
    %v82 = vunpack.c.h.b16 %v66
    %v83 = vunpack.c.l.b16 %v67
    %v84 = vunpack.c.h.b16 %v67
    %v85 = vpack.c.b16 %v79, %v77
    %v86 = vpack.c.b16 %v80, %v78
    %v87 = vpack.c.b16 %v83, %v81
    %v88 = vpack.c.b16 %v84, %v82
    %vm93 = vcmask 261120
    %v95 = vsel %vm93, %v72, 0
    %97 = vmatprep.subr.bf16.mxu0 0
    %98 = vmatpush1.bf16.msra.mxu0 0
    %99 = vmatprep.subr.bf16.mxu0 0
    %100 = vmatpush1.bf16.msra.mxu0 0
    %101 = vmatprep.subr.bf16.mxu0 0
    %102 = vmatpush1.bf16.msra.mxu0 0
    %103 = vmatprep.subr.bf16.mxu0 0
    %104 = vmatpush1.bf16.msra.mxu0 0
    %105 = vmatprep.subr.bf16.mxu0 0
    %106 = vmatpush1.bf16.msra.mxu0 0
    %107 = vmatprep.subr.bf16.mxu0 0
    %108 = vmatpush1.bf16.msra.mxu0 0
    %109 = vmatprep.subr.bf16.mxu0 %v88
    %110 = vmatpush1.bf16.msra.mxu0 %v87
    %111 = vmatprep.subr.bf16.mxu0 %v86
    %112 = vmatpush1.bf16.msra.mxu0 %v85
    %113 = vmatprep.subr.bf16.mxu0 0
    %114 = vmatpush2.bf16.msra.mxu0 0
    %115 = vmatprep.subr.bf16.mxu0 0
    %116 = vmatpush2.bf16.msra.mxu0 0
    %117 = vmatprep.subr.bf16.mxu0 0
    %118 = vmatpush2.bf16.msra.mxu0 0
    %119 = vmatprep.subr.bf16.mxu0 0
    %120 = vmatpush2.bf16.msra.mxu0 0
    %121 = vmatprep.subr.bf16.mxu0 0
    %122 = vmatpush2.bf16.msra.mxu0 0
    %123 = vmatprep.subr.bf16.mxu0 0
    %124 = vmatpush2.bf16.msra.mxu0 0
    %125 = vmatprep.subr.bf16.mxu0 0
    %126 = vmatpush2.bf16.msra.mxu0 0
    %127 = vmatprep.subr.bf16.mxu0 0
    %128 = vmatpush2.bf16.msra.mxu0 0
    %129 = vmatprep.mubr.bf16.mxu0 0
    %130 = vmatmul.mubr.bf16.gmra.mxu0 %v95
    %v131 = vpop.f32.mrf.mxu0
    %v132 = vadd.f32 0.0, %v131
    %v133 = vpop.f32.mrf.mxu0
    %v134 = vadd.f32 0.0, %v133
    %v135 = vpop.f32.mrf.mxu0
    %v136 = vadd.f32 0.0, %v135
    %v137 = vpop.f32.mrf.mxu0
    %v138 = vadd.f32 0.0, %v137
    %139 = vdwg.mxu0
    %v140 = vpack.c.bf16 %v136, %v132
    %v141 = vpack.c.bf16 %v138, %v134
    %143 = vrot.lane.b32.xlu0 %v140, 96
    %v144 = vpop.permute.xlu0 %143
    %146 = vrot.lane.b32.xlu0 %v140, 64
    %v147 = vpop.permute.xlu0 %146
    %149 = vrot.lane.b32.xlu0 %v140, 32
    %v150 = vpop.permute.xlu0 %149
    %153 = vrot.lane.b32.xlu0 %v141, 96
    %v154 = vpop.permute.xlu0 %153
    %v156 = vld [vmem:[%s3] sm:$0x1]
    %v158 = vlaneseq
    %v159 = vshrl.u32 %v158, 7
    %v160 = vsub.s32 0, %v159
    %v161 = vrot.slane %v156, %v160
    %v165 = vunpack.c.l.b16 %v60
    %v166 = vunpack.c.l.b16 %v61
    %v167 = vpack.c.b16 %v166, %v165
    %vm168 = vcmask 785408
    %v170 = vsel %vm168, %v167, 0
    %172 = vmatprep.subr.bf16.mxu0 0
    %173 = vmatpush1.bf16.msra.mxu0 0
    %174 = vmatprep.subr.bf16.mxu0 0
    %175 = vmatpush1.bf16.msra.mxu0 0
    %176 = vmatprep.subr.bf16.mxu0 0
    %177 = vmatpush1.bf16.msra.mxu0 %v154
    %178 = vmatprep.subr.bf16.mxu0 0
    %179 = vmatpush1.bf16.msra.mxu0 %v141
    %180 = vmatprep.subr.bf16.mxu0 0
    %181 = vmatpush1.bf16.msra.mxu0 %v150
    %182 = vmatprep.subr.bf16.mxu0 0
    %183 = vmatpush1.bf16.msra.mxu0 %v147
    %184 = vmatprep.subr.bf16.mxu0 0
    %185 = vmatpush1.bf16.msra.mxu0 %v144
    %186 = vmatprep.subr.bf16.mxu0 0
    %187 = vmatpush1.bf16.msra.mxu0 %v140
    %188 = vmatprep.subr.bf16.mxu0 0
    %189 = vmatpush2.bf16.msra.mxu0 0
    %190 = vmatprep.subr.bf16.mxu0 0
    %191 = vmatpush2.bf16.msra.mxu0 0
    %192 = vmatprep.subr.bf16.mxu0 0
    %193 = vmatpush2.bf16.msra.mxu0 0
    %194 = vmatprep.subr.bf16.mxu0 0
    %195 = vmatpush2.bf16.msra.mxu0 0
    %196 = vmatprep.subr.bf16.mxu0 0
    %197 = vmatpush2.bf16.msra.mxu0 0
    %198 = vmatprep.subr.bf16.mxu0 0
    %199 = vmatpush2.bf16.msra.mxu0 0
    %200 = vmatprep.subr.bf16.mxu0 0
    %201 = vmatpush2.bf16.msra.mxu0 0
    %202 = vmatprep.subr.bf16.mxu0 0
    %203 = vmatpush2.bf16.msra.mxu0 0
    %204 = vmatprep.mubr.bf16.mxu0 0
    %205 = vmatmul.mubr.bf16.gmra.mxu0 %v170
    %v206 = vpop.f32.mrf.mxu0
    %v207 = vadd.f32 %v161, %v206
    %v208 = vpop.f32.mrf.mxu0
    %v209 = vpop.f32.mrf.mxu0
    %v210 = vadd.f32 %v161, %v209
    %v211 = vpop.f32.mrf.mxu0
    %212 = vdwg.mxu0
    %v213 = vtanh.pop %v207
    %v214 = vtanh.pop %v210
    %v215 = vpack.c.bf16 %v214, %v213
    %s216 = scalar_lea.vmem [#allocation7], 32
    %v217 = vld [vmem:[%s216] sm:$0xff]
    %v218 = vld [vmem:[%s216 + $0x8] sm:$0xff]
    %v219 = vld [vmem:[%s216 + $0x10] sm:$0xff]
    %v220 = vld [vmem:[%s216 + $0x18] sm:$0xff]
    %v225 = vunpack.c.l.b16 %v217
    %v226 = vunpack.c.h.b16 %v217
    %v227 = vunpack.c.l.b16 %v218
    %v228 = vunpack.c.h.b16 %v218
    %v229 = vunpack.c.l.b16 %v219
    %v230 = vunpack.c.h.b16 %v219
    %v231 = vunpack.c.l.b16 %v220
    %v232 = vunpack.c.h.b16 %v220
    %v233 = vpack.c.b16 %v227, %v225
    %v234 = vpack.c.b16 %v228, %v226
    %v235 = vpack.c.b16 %v231, %v229
    %v236 = vpack.c.b16 %v232, %v230
    %v242 = vsel %vm93, %v215, 0
    %244 = vmatprep.subr.bf16.mxu0 0
    %245 = vmatpush1.bf16.msra.mxu0 0
    %246 = vmatprep.subr.bf16.mxu0 0
    %247 = vmatpush1.bf16.msra.mxu0 0
    %248 = vmatprep.subr.bf16.mxu0 0
    %249 = vmatpush1.bf16.msra.mxu0 0
    %250 = vmatprep.subr.bf16.mxu0 0
    %251 = vmatpush1.bf16.msra.mxu0 0
    %252 = vmatprep.subr.bf16.mxu0 0
    %253 = vmatpush1.bf16.msra.mxu0 0
    %254 = vmatprep.subr.bf16.mxu0 0
    %255 = vmatpush1.bf16.msra.mxu0 0
    %256 = vmatprep.subr.bf16.mxu0 %v236
    %257 = vmatpush1.bf16.msra.mxu0 %v235
    %258 = vmatprep.subr.bf16.mxu0 %v234
    %259 = vmatpush1.bf16.msra.mxu0 %v233
    %260 = vmatprep.subr.bf16.mxu0 0
    %261 = vmatpush2.bf16.msra.mxu0 0
    %262 = vmatprep.subr.bf16.mxu0 0
    %263 = vmatpush2.bf16.msra.mxu0 0
    %264 = vmatprep.subr.bf16.mxu0 0
    %265 = vmatpush2.bf16.msra.mxu0 0
    %266 = vmatprep.subr.bf16.mxu0 0
    %267 = vmatpush2.bf16.msra.mxu0 0
    %268 = vmatprep.subr.bf16.mxu0 0
    %269 = vmatpush2.bf16.msra.mxu0 0
    %270 = vmatprep.subr.bf16.mxu0 0
    %271 = vmatpush2.bf16.msra.mxu0 0
    %272 = vmatprep.subr.bf16.mxu0 0
    %273 = vmatpush2.bf16.msra.mxu0 0
    %274 = vmatprep.subr.bf16.mxu0 0
    %275 = vmatpush2.bf16.msra.mxu0 0
    %276 = vmatprep.mubr.bf16.mxu0 0
    %277 = vmatmul.mubr.bf16.gmra.mxu0 %v242
    %v278 = vpop.f32.mrf.mxu0
    %v279 = vadd.f32 0.0, %v278
    %v280 = vpop.f32.mrf.mxu0
    %v281 = vadd.f32 0.0, %v280
    %v282 = vpop.f32.mrf.mxu0
    %v283 = vadd.f32 0.0, %v282
    %v284 = vpop.f32.mrf.mxu0
    %v285 = vadd.f32 0.0, %v284
    %286 = vdwg.mxu0
    %v287 = vpack.c.bf16 %v283, %v279
    %v288 = vpack.c.bf16 %v285, %v281
    %290 = vrot.lane.b32.xlu0 %v287, 96
    %v291 = vpop.permute.xlu0 %290
    %293 = vrot.lane.b32.xlu0 %v287, 64
    %v294 = vpop.permute.xlu0 %293
    %296 = vrot.lane.b32.xlu0 %v287, 32
    %v297 = vpop.permute.xlu0 %296
    %300 = vrot.lane.b32.xlu0 %v288, 96
    %v301 = vpop.permute.xlu0 %300
    %s303 = scalar_lea.vmem %s3, 1
    %v304 = vld [vmem:[%s303] sm:$0x1]
    %v306 = vlaneseq
    %v307 = vshrl.u32 %v306, 7
    %v308 = vsub.s32 0, %v307
    %v309 = vrot.slane %v304, %v308
    %311 = vmatprep.subr.bf16.mxu0 0
    %312 = vmatpush1.bf16.msra.mxu0 0
    %313 = vmatprep.subr.bf16.mxu0 0
    %314 = vmatpush1.bf16.msra.mxu0 0
    %315 = vmatprep.subr.bf16.mxu0 0
    %316 = vmatpush1.bf16.msra.mxu0 %v301
    %317 = vmatprep.subr.bf16.mxu0 0
    %318 = vmatpush1.bf16.msra.mxu0 %v288
    %319 = vmatprep.subr.bf16.mxu0 0
    %320 = vmatpush1.bf16.msra.mxu0 %v297
    %321 = vmatprep.subr.bf16.mxu0 0
    %322 = vmatpush1.bf16.msra.mxu0 %v294
    %323 = vmatprep.subr.bf16.mxu0 0
    %324 = vmatpush1.bf16.msra.mxu0 %v291
    %325 = vmatprep.subr.bf16.mxu0 0
    %326 = vmatpush1.bf16.msra.mxu0 %v287
    %327 = vmatprep.subr.bf16.mxu0 0
    %328 = vmatpush2.bf16.msra.mxu0 0
    %329 = vmatprep.subr.bf16.mxu0 0
    %330 = vmatpush2.bf16.msra.mxu0 0
    %331 = vmatprep.subr.bf16.mxu0 0
    %332 = vmatpush2.bf16.msra.mxu0 0
    %333 = vmatprep.subr.bf16.mxu0 0
    %334 = vmatpush2.bf16.msra.mxu0 0
    %335 = vmatprep.subr.bf16.mxu0 0
    %336 = vmatpush2.bf16.msra.mxu0 0
    %337 = vmatprep.subr.bf16.mxu0 0
    %338 = vmatpush2.bf16.msra.mxu0 0
    %339 = vmatprep.subr.bf16.mxu0 0
    %340 = vmatpush2.bf16.msra.mxu0 0
    %341 = vmatprep.subr.bf16.mxu0 0
    %342 = vmatpush2.bf16.msra.mxu0 0
    %343 = vmatprep.mubr.bf16.mxu0 0
    %344 = vmatmul.mubr.bf16.gmra.mxu0 %v170
    %v345 = vpop.f32.mrf.mxu0
    %v346 = vadd.f32 %v309, %v345
    %v347 = vpop.f32.mrf.mxu0
    %v348 = vpop.f32.mrf.mxu0
    %v349 = vadd.f32 %v309, %v348
    %v350 = vpop.f32.mrf.mxu0
    %351 = vdwg.mxu0
    %v352 = vtanh.pop %v346
    %v353 = vtanh.pop %v349
    %v354 = vpack.c.bf16 %v353, %v352
    %s355 = scalar_lea.vmem [#allocation7], 64
    %v356 = vld [vmem:[%s355] sm:$0xff]
    %v357 = vld [vmem:[%s355 + $0x8] sm:$0xff]
    %v358 = vld [vmem:[%s355 + $0x10] sm:$0xff]
    %v359 = vld [vmem:[%s355 + $0x18] sm:$0xff]
    %v364 = vunpack.c.l.b16 %v356
    %v365 = vunpack.c.h.b16 %v356
    %v366 = vunpack.c.l.b16 %v357
    %v367 = vunpack.c.h.b16 %v357
    %v368 = vunpack.c.l.b16 %v358
    %v369 = vunpack.c.h.b16 %v358
    %v370 = vunpack.c.l.b16 %v359
    %v371 = vunpack.c.h.b16 %v359
    %v372 = vpack.c.b16 %v366, %v364
    %v373 = vpack.c.b16 %v367, %v365
    %v374 = vpack.c.b16 %v370, %v368
    %v375 = vpack.c.b16 %v371, %v369
    %v381 = vsel %vm93, %v354, 0
    %383 = vmatprep.subr.bf16.mxu0 0
    %384 = vmatpush1.bf16.msra.mxu0 0
    %385 = vmatprep.subr.bf16.mxu0 0
    %386 = vmatpush1.bf16.msra.mxu0 0
    %387 = vmatprep.subr.bf16.mxu0 0
    %388 = vmatpush1.bf16.msra.mxu0 0
    %389 = vmatprep.subr.bf16.mxu0 0
    %390 = vmatpush1.bf16.msra.mxu0 0
    %391 = vmatprep.subr.bf16.mxu0 0
    %392 = vmatpush1.bf16.msra.mxu0 0
    %393 = vmatprep.subr.bf16.mxu0 0
    %394 = vmatpush1.bf16.msra.mxu0 0
    %395 = vmatprep.subr.bf16.mxu0 %v375
    %396 = vmatpush1.bf16.msra.mxu0 %v374
    %397 = vmatprep.subr.bf16.mxu0 %v373
    %398 = vmatpush1.bf16.msra.mxu0 %v372
    %399 = vmatprep.subr.bf16.mxu0 0
    %400 = vmatpush2.bf16.msra.mxu0 0
    %401 = vmatprep.subr.bf16.mxu0 0
    %402 = vmatpush2.bf16.msra.mxu0 0
    %403 = vmatprep.subr.bf16.mxu0 0
    %404 = vmatpush2.bf16.msra.mxu0 0
    %405 = vmatprep.subr.bf16.mxu0 0
    %406 = vmatpush2.bf16.msra.mxu0 0
    %407 = vmatprep.subr.bf16.mxu0 0
    %408 = vmatpush2.bf16.msra.mxu0 0
    %409 = vmatprep.subr.bf16.mxu0 0
    %410 = vmatpush2.bf16.msra.mxu0 0
    %411 = vmatprep.subr.bf16.mxu0 0
    %412 = vmatpush2.bf16.msra.mxu0 0
    %413 = vmatprep.subr.bf16.mxu0 0
    %414 = vmatpush2.bf16.msra.mxu0 0
    %415 = vmatprep.mubr.bf16.mxu0 0
    %416 = vmatmul.mubr.bf16.gmra.mxu0 %v381
    %v417 = vpop.f32.mrf.mxu0
    %v418 = vadd.f32 0.0, %v417
    %v419 = vpop.f32.mrf.mxu0
    %v420 = vadd.f32 0.0, %v419
    %v421 = vpop.f32.mrf.mxu0
    %v422 = vadd.f32 0.0, %v421
    %v423 = vpop.f32.mrf.mxu0
    %v424 = vadd.f32 0.0, %v423
    %425 = vdwg.mxu0
    %v426 = vpack.c.bf16 %v422, %v418
    %v427 = vpack.c.bf16 %v424, %v420
    %429 = vrot.lane.b32.xlu0 %v426, 96
    %v430 = vpop.permute.xlu0 %429
    %432 = vrot.lane.b32.xlu0 %v426, 64
    %v433 = vpop.permute.xlu0 %432
    %435 = vrot.lane.b32.xlu0 %v426, 32
    %v436 = vpop.permute.xlu0 %435
    %439 = vrot.lane.b32.xlu0 %v427, 96
    %v440 = vpop.permute.xlu0 %439
    %s442 = scalar_lea.vmem %s3, 2
    %v443 = vld [vmem:[%s442] sm:$0x1]
    %v445 = vlaneseq
    %v446 = vshrl.u32 %v445, 7
    %v447 = vsub.s32 0, %v446
    %v448 = vrot.slane %v443, %v447
    %450 = vmatprep.subr.bf16.mxu0 0
    %451 = vmatpush1.bf16.msra.mxu0 0
    %452 = vmatprep.subr.bf16.mxu0 0
    %453 = vmatpush1.bf16.msra.mxu0 0
    %454 = vmatprep.subr.bf16.mxu0 0
    %455 = vmatpush1.bf16.msra.mxu0 %v440
    %456 = vmatprep.subr.bf16.mxu0 0
    %457 = vmatpush1.bf16.msra.mxu0 %v427
    %458 = vmatprep.subr.bf16.mxu0 0
    %459 = vmatpush1.bf16.msra.mxu0 %v436
    %460 = vmatprep.subr.bf16.mxu0 0
    %461 = vmatpush1.bf16.msra.mxu0 %v433
    %462 = vmatprep.subr.bf16.mxu0 0
    %463 = vmatpush1.bf16.msra.mxu0 %v430
    %464 = vmatprep.subr.bf16.mxu0 0
    %465 = vmatpush1.bf16.msra.mxu0 %v426
    %466 = vmatprep.subr.bf16.mxu0 0
    %467 = vmatpush2.bf16.msra.mxu0 0
    %468 = vmatprep.subr.bf16.mxu0 0
    %469 = vmatpush2.bf16.msra.mxu0 0
    %470 = vmatprep.subr.bf16.mxu0 0
    %471 = vmatpush2.bf16.msra.mxu0 0
    %472 = vmatprep.subr.bf16.mxu0 0
    %473 = vmatpush2.bf16.msra.mxu0 0
    %474 = vmatprep.subr.bf16.mxu0 0
    %475 = vmatpush2.bf16.msra.mxu0 0
    %476 = vmatprep.subr.bf16.mxu0 0
    %477 = vmatpush2.bf16.msra.mxu0 0
    %478 = vmatprep.subr.bf16.mxu0 0
    %479 = vmatpush2.bf16.msra.mxu0 0
    %480 = vmatprep.subr.bf16.mxu0 0
    %481 = vmatpush2.bf16.msra.mxu0 0
    %482 = vmatprep.mubr.bf16.mxu0 0
    %483 = vmatmul.mubr.bf16.gmra.mxu0 %v170
    %v484 = vpop.f32.mrf.mxu0
    %v485 = vadd.f32 %v448, %v484
    %v486 = vpop.f32.mrf.mxu0
    %v487 = vpop.f32.mrf.mxu0
    %v488 = vadd.f32 %v448, %v487
    %v489 = vpop.f32.mrf.mxu0
    %490 = vdwg.mxu0
    %v491 = vtanh.pop %v485
    %v492 = vtanh.pop %v488
    %v493 = vpack.c.bf16 %v492, %v491
    %s494 = scalar_lea.vmem [#allocation7], 96
    %v495 = vld [vmem:[%s494] sm:$0xff]
    %v496 = vld [vmem:[%s494 + $0x8] sm:$0xff]
    %v497 = vld [vmem:[%s494 + $0x10] sm:$0xff]
    %v498 = vld [vmem:[%s494 + $0x18] sm:$0xff]
    %v503 = vunpack.c.l.b16 %v495
    %v504 = vunpack.c.h.b16 %v495
    %v505 = vunpack.c.l.b16 %v496
    %v506 = vunpack.c.h.b16 %v496
    %v507 = vunpack.c.l.b16 %v497
    %v508 = vunpack.c.h.b16 %v497
    %v509 = vunpack.c.l.b16 %v498
    %v510 = vunpack.c.h.b16 %v498
    %v511 = vpack.c.b16 %v505, %v503
    %v512 = vpack.c.b16 %v506, %v504
    %v513 = vpack.c.b16 %v509, %v507
    %v514 = vpack.c.b16 %v510, %v508
    %v520 = vsel %vm93, %v493, 0
    %522 = vmatprep.subr.bf16.mxu0 0
    %523 = vmatpush1.bf16.msra.mxu0 0
    %524 = vmatprep.subr.bf16.mxu0 0
    %525 = vmatpush1.bf16.msra.mxu0 0
    %526 = vmatprep.subr.bf16.mxu0 0
    %527 = vmatpush1.bf16.msra.mxu0 0
    %528 = vmatprep.subr.bf16.mxu0 0
    %529 = vmatpush1.bf16.msra.mxu0 0
    %530 = vmatprep.subr.bf16.mxu0 0
    %531 = vmatpush1.bf16.msra.mxu0 0
    %532 = vmatprep.subr.bf16.mxu0 0
    %533 = vmatpush1.bf16.msra.mxu0 0
    %534 = vmatprep.subr.bf16.mxu0 %v514
    %535 = vmatpush1.bf16.msra.mxu0 %v513
    %536 = vmatprep.subr.bf16.mxu0 %v512
    %537 = vmatpush1.bf16.msra.mxu0 %v511
    %538 = vmatprep.subr.bf16.mxu0 0
    %539 = vmatpush2.bf16.msra.mxu0 0
    %540 = vmatprep.subr.bf16.mxu0 0
    %541 = vmatpush2.bf16.msra.mxu0 0
    %542 = vmatprep.subr.bf16.mxu0 0
    %543 = vmatpush2.bf16.msra.mxu0 0
    %544 = vmatprep.subr.bf16.mxu0 0
    %545 = vmatpush2.bf16.msra.mxu0 0
    %546 = vmatprep.subr.bf16.mxu0 0
    %547 = vmatpush2.bf16.msra.mxu0 0
    %548 = vmatprep.subr.bf16.mxu0 0
    %549 = vmatpush2.bf16.msra.mxu0 0
    %550 = vmatprep.subr.bf16.mxu0 0
    %551 = vmatpush2.bf16.msra.mxu0 0
    %552 = vmatprep.subr.bf16.mxu0 0
    %553 = vmatpush2.bf16.msra.mxu0 0
    %554 = vmatprep.mubr.bf16.mxu0 0
    %555 = vmatmul.mubr.bf16.gmra.mxu0 %v520
    %v556 = vpop.f32.mrf.mxu0
    %v557 = vadd.f32 0.0, %v556
    %v558 = vpop.f32.mrf.mxu0
    %v559 = vadd.f32 0.0, %v558
    %v560 = vpop.f32.mrf.mxu0
    %v561 = vadd.f32 0.0, %v560
    %v562 = vpop.f32.mrf.mxu0
    %v563 = vadd.f32 0.0, %v562
    %564 = vdwg.mxu0
    %v565 = vpack.c.bf16 %v561, %v557
    %v566 = vpack.c.bf16 %v563, %v559
    %568 = vrot.lane.b32.xlu0 %v565, 96
    %v569 = vpop.permute.xlu0 %568
    %571 = vrot.lane.b32.xlu0 %v565, 64
    %v572 = vpop.permute.xlu0 %571
    %574 = vrot.lane.b32.xlu0 %v565, 32
    %v575 = vpop.permute.xlu0 %574
    %578 = vrot.lane.b32.xlu0 %v566, 96
    %v579 = vpop.permute.xlu0 %578
    %s581 = scalar_lea.vmem %s3, 3
    %v582 = vld [vmem:[%s581] sm:$0x1]
    %v584 = vlaneseq
    %v585 = vshrl.u32 %v584, 7
    %v586 = vsub.s32 0, %v585
    %v587 = vrot.slane %v582, %v586
    %589 = vmatprep.subr.bf16.mxu0 0
    %590 = vmatpush1.bf16.msra.mxu0 0
    %591 = vmatprep.subr.bf16.mxu0 0
    %592 = vmatpush1.bf16.msra.mxu0 0
    %593 = vmatprep.subr.bf16.mxu0 0
    %594 = vmatpush1.bf16.msra.mxu0 %v579
    %595 = vmatprep.subr.bf16.mxu0 0
    %596 = vmatpush1.bf16.msra.mxu0 %v566
    %597 = vmatprep.subr.bf16.mxu0 0
    %598 = vmatpush1.bf16.msra.mxu0 %v575
    %599 = vmatprep.subr.bf16.mxu0 0
    %600 = vmatpush1.bf16.msra.mxu0 %v572
    %601 = vmatprep.subr.bf16.mxu0 0
    %602 = vmatpush1.bf16.msra.mxu0 %v569
    %603 = vmatprep.subr.bf16.mxu0 0
    %604 = vmatpush1.bf16.msra.mxu0 %v565
    %605 = vmatprep.subr.bf16.mxu0 0
    %606 = vmatpush2.bf16.msra.mxu0 0
    %607 = vmatprep.subr.bf16.mxu0 0
    %608 = vmatpush2.bf16.msra.mxu0 0
    %609 = vmatprep.subr.bf16.mxu0 0
    %610 = vmatpush2.bf16.msra.mxu0 0
    %611 = vmatprep.subr.bf16.mxu0 0
    %612 = vmatpush2.bf16.msra.mxu0 0
    %613 = vmatprep.subr.bf16.mxu0 0
    %614 = vmatpush2.bf16.msra.mxu0 0
    %615 = vmatprep.subr.bf16.mxu0 0
    %616 = vmatpush2.bf16.msra.mxu0 0
    %617 = vmatprep.subr.bf16.mxu0 0
    %618 = vmatpush2.bf16.msra.mxu0 0
    %619 = vmatprep.subr.bf16.mxu0 0
    %620 = vmatpush2.bf16.msra.mxu0 0
    %621 = vmatprep.mubr.bf16.mxu0 0
    %622 = vmatmul.mubr.bf16.gmra.mxu0 %v170
    %v623 = vpop.f32.mrf.mxu0
    %v624 = vadd.f32 %v587, %v623
    %v625 = vpop.f32.mrf.mxu0
    %v626 = vpop.f32.mrf.mxu0
    %v627 = vadd.f32 %v587, %v626
    %v628 = vpop.f32.mrf.mxu0
    %629 = vdwg.mxu0
    %v630 = vtanh.pop %v624
    %v631 = vtanh.pop %v627
    %634 = vrot.lane.b32.xlu0 %v352, 32
    %v635 = vpop.permute.xlu0 %634
    %636 = vrot.lane.b32.xlu0 %v353, 32
    %v637 = vpop.permute.xlu0 %636
    %642 = vrot.lane.b32.xlu0 %v491, 64
    %v643 = vpop.permute.xlu0 %642
    %644 = vrot.lane.b32.xlu0 %v492, 64
    %v645 = vpop.permute.xlu0 %644
    %650 = vrot.lane.b32.xlu0 %v630, 96
    %v651 = vpop.permute.xlu0 %650
    %652 = vrot.lane.b32.xlu0 %v631, 96
    %v653 = vpop.permute.xlu0 %652
    %v656 = vsel %vm93, %v213, %v635
    %v657 = vsel %vm93, %v214, %v637
    %vm658 = vcmask 523264
    %v659 = vsel %vm658, %v656, %v643
    %v660 = vsel %vm658, %v657, %v645
    %v661 = vsel %vm168, %v659, %v651
    %v662 = vsel %vm168, %v660, %v653
    %663 = vst [vmem:[#allocation8] sm:$0xff] %v661
    %664 = vst [vmem:[#allocation8 + $0x8] sm:$0xff] %v662
    // Predicated region
    $region30: #{tpu_custom_call.1} parent=1 // pred_check
      _
    $region31: #{tpu_custom_call.1} parent=1 // pred_check_branch
      %666 = sbr.rel (0) target = $region33
    $region32: #{tpu_custom_call.1} parent=1 // pred_region
      %s668 = ssub.s32 256, 256
      %669 = vsyncadd [#allocation4], %s668
      %s670 = sshll.u32 [#allocation8], 4
      %s671 = int_to_ptr.vmem [resolvable:$true] %s670
      %676 = dma.vmem_to_hbm [thread:$0]  %s671, 256, %s4, [#allocation4], 128, 128, 8
    $region33: #{tpu_custom_call.1} parent=1 // pred_fallthru
      _
    // Predicated region
    $region34: #{tpu_custom_call.1} parent=1 // pred_check
      _
    $region35: #{tpu_custom_call.1} parent=1 // pred_check_branch
      %678 = sbr.rel (0) target = $region37
    $region36: #{tpu_custom_call.1} parent=1 // pred_region
      %679 = dma.done [#allocation4], 256
    $region37: #{tpu_custom_call.1} parent=1 // pred_fallthru
      _
    %680 = vsyncpa [#allocation3], 1
    %681 = vsyncpa [#allocation6], 1
    %682 = vsyncpa [#allocation4], 1

</llo_original>
